<compile_context>
chip_gen: v5e
topology: v5e:2x2
jax: 0.10.0
libtpu: 0.0.40
codegen_flags: <defaults>
</compile_context>

<pallas_src>
import math
from functools import partial

import jax
import jax.numpy as jnp
from jax import lax
from jax.experimental import pallas as pl
from jax.experimental.pallas import tpu as pltpu


# ---------------------------------------------------------------------------
# Generation-aware VMEM budgets (v5e/v6e: 128 MiB, v7x: 64 MiB per core)
# ---------------------------------------------------------------------------
def _vmem_budgets():
    try:
        cap = int(pltpu.get_tpu_info().vmem_capacity_bytes)
    except Exception:
        cap = 64 * 1024 * 1024                 # conservative (v7x) fallback
    vmem_limit = (cap * 3) // 4                # 96 MiB on v5e/v6e, 48 MiB on v7x
    fused_budget = vmem_limit // 3             # per-grid-step working-set budget
    fused_adj_limit = fused_budget // 2        # per-batch adj size routed to fused path
    return vmem_limit, fused_budget, fused_adj_limit


# ---------------------------------------------------------------------------
# Path 1: fused per-batch-block kernel (adj read from HBM exactly once)
# ---------------------------------------------------------------------------
def _gcn_fused_kernel(x_ref, adj_ref, w_ref, b_ref, out_ref, *, matmul_dtype):
    # x_ref: (BB, N, C_in)  adj_ref: (BB, N, N)  w_ref: (C_in, C_out)
    # b_ref: (1, C_out)     out_ref: (BB, C_out, N)   <- already transposed
    BB, N, C_in = x_ref.shape
    C_out = w_ref.shape[1]

    adj = adj_ref[...]
    x = x_ref[...]

    # d = rsqrt(rowsum(adj) + 1e-5)   (degree math in f32; rsqrt rides the EUP)
    deg = jnp.sum(adj.astype(jnp.float32), axis=-1, keepdims=True)      # (BB, N, 1)
    d = lax.rsqrt(deg + 1e-5)

    # support = X @ W as one flattened (BB*N, C_in) x (C_in, C_out) MXU matmul
    x2 = x.reshape(BB * N, C_in)
    w = w_ref[...]
    if matmul_dtype is not None:
        x2 = x2.astype(matmul_dtype)
        w = w.astype(matmul_dtype)
    support = jnp.dot(x2, w, preferred_element_type=jnp.float32)
    support = support.reshape(BB, N, C_out)                             # f32

    # Algebraic fold of D^-1/2 A D^-1/2:   res = d * (A @ (d * support)) + b
    s_scaled = d * support
    adj_mm, s_mm = adj, s_scaled
    if matmul_dtype is not None:
        adj_mm = adj.astype(matmul_dtype)       # cast in-VMEM, not in the wrapper
        s_mm = s_scaled.astype(matmul_dtype)
    y = jnp.einsum("bmk,bkc->bmc", adj_mm, s_mm,
                   preferred_element_type=jnp.float32)                  # (BB, N, C_out)
    res = d * y + b_ref[...]

    # Store already transposed (BB, C_out, N): lane-dense last dim, no
    # wrapper-side swapaxes HBM pass.  2-D transposes per batch (XLU slot).
    for i in range(BB):
        out_ref[i] = res[i].T.astype(out_ref.dtype)


def _gcn_fused(x, adj, weight, bias2d, *, batch_block, matmul_dtype, vmem_limit):
    B, N, C_in = x.shape
    C_out = weight.shape[1]
    BB = batch_block
    kernel = partial(_gcn_fused_kernel, matmul_dtype=matmul_dtype)
    cost = pl.CostEstimate(
        flops=2 * B * N * C_in * C_out + 2 * B * N * N * C_out,
        transcendentals=B * N,
        bytes_accessed=int(adj.size * adj.dtype.itemsize
                           + x.size * x.dtype.itemsize
                           + B * C_out * N * x.dtype.itemsize
                           + weight.size * weight.dtype.itemsize
                           + bias2d.size * bias2d.dtype.itemsize),
    )
    return pl.pallas_call(
        kernel,
        out_shape=jax.ShapeDtypeStruct((B, C_out, N), x.dtype),
        grid_spec=pltpu.PrefetchScalarGridSpec(
            num_scalar_prefetch=0,
            grid=(B // BB,),
            in_specs=[
                pl.BlockSpec((BB, N, C_in), lambda b: (b, 0, 0)),
                pl.BlockSpec((BB, N, N), lambda b: (b, 0, 0)),
                pl.BlockSpec((C_in, C_out), lambda b: (0, 0)),
                pl.BlockSpec((1, C_out), lambda b: (0, 0)),
            ],
            out_specs=pl.BlockSpec((BB, C_out, N), lambda b: (b, 0, 0)),
        ),
        compiler_params=pltpu.CompilerParams(
            dimension_semantics=("parallel",),
            vmem_limit_bytes=vmem_limit,
        ),
        cost_estimate=cost,
    )(x, adj, weight, bias2d)


# ---------------------------------------------------------------------------
# Path 2: tiled kernel for large N (adj blocked (TM, TK), f32 accumulator,
# reduction axis last / 'arbitrary', transposed lane-dense output store).
# d and the d-scaled support are global quantities -> precomputed in the
# wrapper with one streaming XLA pass over adj.
# ---------------------------------------------------------------------------
def _gcn_tiled_kernel(adj_ref, s_ref, d_ref, b_ref, out_ref, acc_ref, *, matmul_dtype):
    # adj_ref: (1, TM, TK)  s_ref: (1, TK, C_out)  d_ref: (1, TM, 1)
    # b_ref: (1, C_out)     out_ref: (1, C_out, TM)  acc_ref: (TM, C_out) f32
    k = pl.program_id(2)

    @pl.when(k == 0)
    def _():
        acc_ref[...] = jnp.zeros_like(acc_ref)

    a = adj_ref[0]
    s = s_ref[0]
    if matmul_dtype is not None:
        # Cast in-VMEM after the DMA: adj stays f32 in HBM (no extra HBM pass).
        a = a.astype(matmul_dtype)
        if s.dtype != matmul_dtype:
            s = s.astype(matmul_dtype)
    acc_ref[...] += jnp.dot(a, s, preferred_element_type=jnp.float32)

    @pl.when(k == pl.num_programs(2) - 1)
    def _():
        res = d_ref[0] * acc_ref[...] + b_ref[...]        # (TM, C_out) f32
        # Lane-dense store: TM % 128 == 0, transpose rides the XLU slot.
        out_ref[0] = res.T.astype(out_ref.dtype)


def _pick_tile(n, pref, multiple):
    """Largest tile <= pref that divides n and is a multiple of `multiple`."""
    if n <= pref:
        return n
    t = (pref // multiple) * multiple
    while t >= multiple:
        if n % t == 0:
            return t
        t -= multiple
    return n  # unreachable once n is padded to a multiple of `multiple`


def _gcn_tiled(x, adj, weight, bias2d, *, matmul_dtype, vmem_limit):
    B, N, C_in = x.shape
    C_out = weight.shape[1]

    # Global degree + d-scaled support (the D^-1/2 column scaling needs the full
    # rowsum first, so one streaming pass over adj is unavoidable here).
    deg = jnp.sum(adj.astype(jnp.float32), axis=-1, keepdims=True)      # (B, N, 1)
    d = lax.rsqrt(deg + 1e-5)
    support = jnp.dot(x.reshape(B * N, C_in), weight,
                      preferred_element_type=jnp.float32).reshape(B, N, C_out)
    s_scaled = d * support
    if matmul_dtype is not None:
        # Small tensor: cast at the producer (fuses); adj is NOT cast here.
        s_scaled = s_scaled.astype(matmul_dtype)

    # Pad N to a multiple of 128 so every tile divides evenly and the transposed
    # output tile (C_out, TM) is lane-dense.  Zero-padded rows/cols contribute
    # nothing and are sliced off below.
    Np = ((N + 127) // 128) * 128
    if Np != N:
        # TODO(synk): the pad costs one extra pass over adj; only taken when the
        # large-N tiled path is selected with N % 128 != 0.
        pad = Np - N
        adj = jnp.pad(adj, ((0, 0), (0, pad), (0, pad)))
        s_scaled = jnp.pad(s_scaled, ((0, 0), (0, pad), (0, 0)))
        d = jnp.pad(d, ((0, 0), (0, pad), (0, 0)))

    tm = _pick_tile(Np, 512, 128)
    tk = _pick_tile(Np, 2048, 128)
    # Note: if C_out ever grows very large (>= 512), add a C_out grid axis; and
    # if the adj DMA is still exposed, pipeline_mode=pl.Buffered(3) on its spec.

    kernel = partial(_gcn_tiled_kernel, matmul_dtype=matmul_dtype)
    cost = pl.CostEstimate(
        flops=2 * B * Np * Np * C_out,
        transcendentals=0,
        bytes_accessed=int(adj.size * adj.dtype.itemsize
                           + s_scaled.size * s_scaled.dtype.itemsize
                           + d.size * d.dtype.itemsize
                           + B * C_out * Np * x.dtype.itemsize),
    )
    out = pl.pallas_call(
        kernel,
        out_shape=jax.ShapeDtypeStruct((B, C_out, Np), x.dtype),
        grid_spec=pltpu.PrefetchScalarGridSpec(
            num_scalar_prefetch=0,
            grid=(B, Np // tm, Np // tk),
            in_specs=[
                pl.BlockSpec((1, tm, tk), lambda b, m, k: (b, m, k)),
                pl.BlockSpec((1, tk, C_out), lambda b, m, k: (b, k, 0)),
                pl.BlockSpec((1, tm, 1), lambda b, m, k: (b, m, 0)),
                pl.BlockSpec((1, C_out), lambda b, m, k: (0, 0)),
            ],
            out_specs=pl.BlockSpec((1, C_out, tm), lambda b, m, k: (b, 0, m)),
            scratch_shapes=[pltpu.VMEM((tm, C_out), jnp.float32)],
        ),
        compiler_params=pltpu.CompilerParams(
            dimension_semantics=("parallel", "parallel", "arbitrary"),
            vmem_limit_bytes=vmem_limit,
        ),
        cost_estimate=cost,
    )(adj, s_scaled, d, bias2d)

    if Np != N:
        out = out[..., :N]
    return out


# ---------------------------------------------------------------------------
# Public wrapper
# ---------------------------------------------------------------------------
def _fused_per_batch_bytes(N, C_in, C_out, matmul_dtype):
    # Real per-batch VMEM working set of the fused kernel: double-buffered
    # input/output tiles + live f32 temporaries (+ bf16 copies when enabled).
    extra = 2 if matmul_dtype is not None else 0
    adj_b = N * N * (4 * 2 + extra)
    x_b = N * C_in * (4 * 2 + extra)
    out_b = N * C_out * 4 * 2
    tmp_b = N * C_out * (4 * 3 + extra)        # support, s_scaled, y/res (+ bf16 s_mm)
    return adj_b + x_b + out_b + tmp_b + N * 8


def _pick_batch_block(B, N, C_in, C_out, matmul_dtype, budget_bytes):
    per_batch = _fused_per_batch_bytes(N, C_in, C_out, matmul_dtype)
    bb = max(1, budget_bytes // per_batch)
    bb = min(bb, B)
    # Keep >= ~8 grid steps when B permits: 2 cores (v7x megacore) x a few
    # iterations so DMA actually overlaps compute instead of being exposed.
    bb = min(bb, max(1, B // 8))
    while B % bb != 0:
        bb -= 1
    return bb


def gcn_forward(x, adj, weight, bias, *, matmul_dtype=None, force_tiled=False):
    """x: (B, N, C_in), adj: (B, N, N), weight: (C_in, C_out), bias: (C_out,).
    Returns (B, C_out, N) -- matches the PyTorch module's forward."""
    B, N, C_in = x.shape
    C_out = weight.shape[1]
    bias2d = bias.reshape(1, C_out)

    vmem_limit, fused_budget, fused_adj_limit = _vmem_budgets()
    adj_bytes = N * N * adj.dtype.itemsize
    per_batch_ws = _fused_per_batch_bytes(N, C_in, C_out, matmul_dtype)
    use_tiled = (force_tiled or adj_bytes > fused_adj_limit
                 or per_batch_ws > fused_budget)

    if use_tiled:
        return _gcn_tiled(x, adj, weight, bias2d,
                          matmul_dtype=matmul_dtype, vmem_limit=vmem_limit)
    bb = _pick_batch_block(B, N, C_in, C_out, matmul_dtype, fused_budget)
    return _gcn_fused(x, adj, weight, bias2d, batch_block=bb,
                      matmul_dtype=matmul_dtype, vmem_limit=vmem_limit)


def gcn_reference(x, adj, weight, bias):
    deg = jnp.sum(adj, axis=-1) + 1e-5
    d_inv_sqrt = deg ** (-0.5)
    adj_norm = d_inv_sqrt[..., :, None] * adj * d_inv_sqrt[..., None, :]
    support = jnp.einsum("bnc,co->bno", x, weight, precision=lax.Precision.HIGHEST)
    res = jnp.einsum("bmn,bno->bmo", adj_norm, support,
                     precision=lax.Precision.HIGHEST) + bias
    return jnp.swapaxes(res, -1, -2)


if __name__ == "__main__":
    B, N, C_in, C_out = 2, 16, 8, 32

    key = jax.random.PRNGKey(0)
    kx, ka, kw, kb = jax.random.split(key, 4)

    x = jax.random.normal(kx, (B, N, C_in), dtype=jnp.float32)
    adj = jax.random.uniform(ka, (B, N, N), dtype=jnp.float32)  # non-negative adjacency

    # Xavier-uniform weight (fan_in=C_in, fan_out=C_out); non-zero bias to
    # actually exercise the bias-add path (module init is zeros).
    bound = math.sqrt(6.0 / (C_in + C_out))
    weight = jax.random.uniform(kw, (C_in, C_out), minval=-bound, maxval=bound,
                                dtype=jnp.float32)
    bias = 0.1 * jax.random.normal(kb, (C_out,), dtype=jnp.float32)

    ref = gcn_reference(x, adj, weight, bias)

    # Fused (batch-blocked, adj-read-once) path — selected at this problem size.
    out = jax.block_until_ready(gcn_forward(x, adj, weight, bias))
    assert out.shape == (B, C_out, N), out.shape
    err = float(jnp.max(jnp.abs(out - ref)))
    assert err < 1e-4, err

    # Also exercise the tiled (large-N) path for correctness.
    out_t = jax.block_until_ready(gcn_forward(x, adj, weight, bias, force_tiled=True))
    assert out_t.shape == (B, C_out, N), out_t.shape
    err_t = float(jnp.max(jnp.abs(out_t - ref)))
    assert err_t < 1e-4, err_t

    print("KERNEL_OK")
</pallas_src>

<mosaic_0001>
module attributes {stable_mosaic.version = 11 : i64} {
  func.func @_gcn_fused_kernel(%arg0: i32, %arg1: memref<1x16x8xf32, #tpu.memory_space<vmem>>, %arg2: memref<1x16x16xf32, #tpu.memory_space<vmem>>, %arg3: memref<8x32xf32, #tpu.memory_space<vmem>>, %arg4: memref<1x32xf32, #tpu.memory_space<vmem>>, %arg5: memref<1x32x16xf32, #tpu.memory_space<vmem>>) attributes {dimension_semantics = [#tpu.dimension_semantics<parallel>], iteration_bounds = array<i64: 2>, scalar_prefetch = 0 : i64, scratch_operands = 0 : i64, tpu.core_type = #tpu.core_type<tc>, window_params = [{transform_indices = @transform_0, window_bounds = array<i64: 1, 16, 8>}, {transform_indices = @transform_1, window_bounds = array<i64: 1, 16, 16>}, {pipeline_mode = #tpu.pipeline_mode<synchronous>, transform_indices = @transform_2, window_bounds = array<i64: 8, 32>}, {pipeline_mode = #tpu.pipeline_mode<synchronous>, transform_indices = @transform_3, window_bounds = array<i64: 1, 32>}, {transform_indices = @transform_4, window_bounds = array<i64: 1, 32, 16>}]} {
    %c0 = arith.constant 0 : index
    %c0_0 = arith.constant 0 : index
    %c0_1 = arith.constant 0 : index
    %0 = vector.load %arg2[%c0, %c0_0, %c0_1] : memref<1x16x16xf32, #tpu.memory_space<vmem>>, vector<1x16x16xf32>
    %c0_2 = arith.constant 0 : index
    %c0_3 = arith.constant 0 : index
    %c0_4 = arith.constant 0 : index
    %1 = vector.load %arg1[%c0_2, %c0_3, %c0_4] : memref<1x16x8xf32, #tpu.memory_space<vmem>>, vector<1x16x8xf32>
    %cst = arith.constant dense<0.000000e+00> : vector<1x16xf32>
    %2 = vector.multi_reduction <add>, %0, %cst [2] : vector<1x16x16xf32> to vector<1x16xf32>
    %3 = vector.shape_cast %2 : vector<1x16xf32> to vector<1x16x1xf32>
    %cst_5 = arith.constant 9.99999974E-6 : f32
    %4 = vector.broadcast %cst_5 : f32 to vector<1x16x1xf32>
    %5 = arith.addf %3, %4 : vector<1x16x1xf32>
    %6 = math.rsqrt %5 : vector<1x16x1xf32>
    %7 = vector.shape_cast %1 : vector<1x16x8xf32> to vector<16x8xf32>
    %c0_6 = arith.constant 0 : index
    %c0_7 = arith.constant 0 : index
    %8 = vector.load %arg3[%c0_6, %c0_7] : memref<8x32xf32, #tpu.memory_space<vmem>>, vector<8x32xf32>
    %cst_8 = arith.constant dense<0.000000e+00> : vector<16x32xf32>
    %9 = tpu.matmul %7, %8, %cst_8 {dimension_numbers = #tpu.dot_dimension_numbers<[1], [0], [0], [1], [0, 0, 1, 1], [], []>} : vector<16x8xf32>, vector<8x32xf32>, vector<16x32xf32> -> vector<16x32xf32>
    %10 = vector.shape_cast %9 : vector<16x32xf32> to vector<1x16x32xf32>
    %11 = vector.broadcast %6 : vector<1x16x1xf32> to vector<1x16x32xf32>
    %12 = arith.mulf %11, %10 : vector<1x16x32xf32>
    "tpu.trace_start"() <{level = 10 : i32, message = "bmk,bkc->bmc"}> : () -> ()
    %cst_9 = arith.constant dense<0.000000e+00> : vector<1x16x32xf32>
    %13 = tpu.matmul %0, %12, %cst_9 {dimension_numbers = #tpu.dot_dimension_numbers<[2], [1], [1], [2], [0, 0, 0, 1, 1, 2], [0], [0]>} : vector<1x16x16xf32>, vector<1x16x32xf32>, vector<1x16x32xf32> -> vector<1x16x32xf32>
    "tpu.trace_stop"() : () -> ()
    %14 = vector.broadcast %6 : vector<1x16x1xf32> to vector<1x16x32xf32>
    %15 = arith.mulf %14, %13 : vector<1x16x32xf32>
    %c0_10 = arith.constant 0 : index
    %c0_11 = arith.constant 0 : index
    %16 = vector.load %arg4[%c0_10, %c0_11] : memref<1x32xf32, #tpu.memory_space<vmem>>, vector<1x32xf32>
    %17 = vector.shape_cast %16 : vector<1x32xf32> to vector<1x1x32xf32>
    %18 = vector.broadcast %17 : vector<1x1x32xf32> to vector<1x16x32xf32>
    %19 = arith.addf %15, %18 : vector<1x16x32xf32>
    %20 = vector.shape_cast %19 : vector<1x16x32xf32> to vector<16x32xf32>
    %21 = tpu.transpose %20, [1, 0] : vector<16x32xf32> -> vector<32x16xf32>
    %c0_12 = arith.constant 0 : index
    %c0_13 = arith.constant 0 : index
    %c0_14 = arith.constant 0 : index
    %22 = vector.load %arg5[%c0_12, %c0_13, %c0_14] : memref<1x32x16xf32, #tpu.memory_space<vmem>>, vector<1x32x16xf32>
    %23 = vector.shape_cast %22 : vector<1x32x16xf32> to vector<32x16xf32>
    %24 = vector.shape_cast %21 : vector<32x16xf32> to vector<1x32x16xf32>
    tpu.vector_store %arg5[%c0_12, %c0_13, %c0_14], %24 {strides = array<i32>} : memref<1x32x16xf32, #tpu.memory_space<vmem>>, vector<1x32x16xf32>,
    return
  }
  func.func @transform_0(%arg0: i32) -> (i32, i32, i32) {
    %c0_i32 = arith.constant 0 : i32
    %c0_i32_0 = arith.constant 0 : i32
    %c0_i32_1 = arith.constant 0 : i32
    return %arg0, %c0_i32, %c0_i32_0 : i32, i32, i32
  }
  func.func @transform_1(%arg0: i32) -> (i32, i32, i32) {
    %c0_i32 = arith.constant 0 : i32
    %c0_i32_0 = arith.constant 0 : i32
    %c0_i32_1 = arith.constant 0 : i32
    return %arg0, %c0_i32, %c0_i32_0 : i32, i32, i32
  }
  func.func @transform_2(%arg0: i32) -> (i32, i32) {
    %c0_i32 = arith.constant 0 : i32
    %c0_i32_0 = arith.constant 0 : i32
    %c0_i32_1 = arith.constant 0 : i32
    return %c0_i32, %c0_i32_0 : i32, i32
  }
  func.func @transform_3(%arg0: i32) -> (i32, i32) {
    %c0_i32 = arith.constant 0 : i32
    %c0_i32_0 = arith.constant 0 : i32
    %c0_i32_1 = arith.constant 0 : i32
    return %c0_i32, %c0_i32_0 : i32, i32
  }
  func.func @transform_4(%arg0: i32) -> (i32, i32, i32) {
    %c0_i32 = arith.constant 0 : i32
    %c0_i32_0 = arith.constant 0 : i32
    %c0_i32_1 = arith.constant 0 : i32
    return %arg0, %c0_i32, %c0_i32_0 : i32, i32, i32
  }
}

</mosaic_0001>

<llo_original>
// kernel: tpu_custom_call.1
$region0: #{tpu_custom_call.1}
  #allocation0 [shape = 'u32[]', space=smem, size = 0x4, offset = 0x4, fixed_abs, tag = 'smem constant byte address 0x4 - core index']
  #allocation1 [shape = 'u32[72,128]{1,0:T(1,128)}', space=vmem, size = 0x9000, scoped, tag = 'internal scratch']
  %s0 = inlined_call_operand.vmem [shape: f32[2,16,8], index: 0, kind: input, shape index: {}]
  %s1 = inlined_call_operand.vmem [shape: f32[2,16,16], index: 1, kind: input, shape index: {}]
  %s2 = inlined_call_operand.vmem [shape: f32[8,32], index: 2, kind: input, shape index: {}]
  %s3 = inlined_call_operand.vmem [shape: f32[1,32], index: 3, kind: input, shape index: {}]
  %s4 = inlined_call_operand.vmem [shape: f32[2,32,16], index: 4, kind: output, shape index: {}]
  %s5 = sld [smem:[#allocation0]]
  $region49: #{tpu_custom_call.1} parent=0
    _
  %s7 = ssub.s32 1, %s5
  %s8 = scalar_select 0, %s7, %s5
  loop: start=0, step=1, limit=4
  $region2: #{tpu_custom_call.1} parent=0 // loop_pre_header
    _
  $region3: #{tpu_custom_call.1} parent=0 // loop_header
    %s10 = sphi 0, %s14
    %p11 = scmp.ge.s32.totalorder %s10, 4
    %s20 = sphi 0, %s22
    %s23 = sphi 0, %s20
    %s24 = sphi 0, %s23
    %s40 = sphi 0, %s24
    %s46 = sphi 0, %s48
    %s49 = sphi 0, %s46
    %s50 = sphi 0, %s49
    %s66 = sphi 0, %s50
    %s70 = sphi 0, %s70
    %s72 = sphi 0, %s70
    %s73 = sphi 0, %s72
    %s87 = sphi 0, %s73
    %s91 = sphi 0, %s91
    %s93 = sphi 0, %s91
    %s94 = sphi 0, %s93
    %s108 = sphi 0, %s94
    %s114 = sphi 0, %s116
    %s117 = sphi 0, %s114
    %s118 = sphi 0, %s117
    %s134 = sphi 0, %s118
  $region4: #{tpu_custom_call.1} parent=0 // loop_header_branch
    %13 = sbr.rel (%p11) target = $region8
  $region5: #{tpu_custom_call.1} parent=0 // loop_body
    %s15 = ssub.s32 %s10, 1
    %s16 = ssub.s32 %s10, 2
    %s17 = sadd.s32 %s10, 1
    %s18 = ssub.s32 %s10, %s17
    %p19 = scmp.eq.s32.totalorder %s18, 0
    %s21 = sadd.s32 %s20, 1
    %s22 = scalar_select %p19, %s20, %s21
    %p25 = pneg %p19
    %p26 = scmp.eq.s32.totalorder %s10, 1
    %p27 = por %p25, %p26
    %p28 = scmp.ne.s32.totalorder %s20, %s23
    %p29 = scmp.eq.s32.totalorder %s10, 0
    %p30 = por %p28, %p29
    %p31 = scmp.ne.s32.totalorder %s20, %s23
    %p32 = scmp.eq.s32.totalorder %s15, 1
    %p33 = por %p31, %p32
    %p34 = scmp.ne.s32.totalorder %s23, %s24
    %p35 = scmp.eq.s32.totalorder %s15, 0
    %p36 = por %p34, %p35
    %p37 = scmp.ne.s32.totalorder %s23, %s24
    %p38 = scmp.eq.s32.totalorder %s16, 1
    %p39 = por %p37, %p38
    %p41 = scmp.ne.s32.totalorder %s24, %s40
    %p42 = scmp.eq.s32.totalorder %s16, 0
    %p43 = por %p41, %p42
    %s44 = ssub.s32 %s10, %s17
    %p45 = scmp.eq.s32.totalorder %s44, 0
    %s47 = sadd.s32 %s46, 1
    %s48 = scalar_select %p45, %s46, %s47
    %p51 = pneg %p45
    %p52 = scmp.eq.s32.totalorder %s10, 1
    %p53 = por %p51, %p52
    %p54 = scmp.ne.s32.totalorder %s46, %s49
    %p55 = scmp.eq.s32.totalorder %s10, 0
    %p56 = por %p54, %p55
    %p57 = scmp.ne.s32.totalorder %s46, %s49
    %p58 = scmp.eq.s32.totalorder %s15, 1
    %p59 = por %p57, %p58
    %p60 = scmp.ne.s32.totalorder %s49, %s50
    %p61 = scmp.eq.s32.totalorder %s15, 0
    %p62 = por %p60, %p61
    %p63 = scmp.ne.s32.totalorder %s49, %s50
    %p64 = scmp.eq.s32.totalorder %s16, 1
    %p65 = por %p63, %p64
    %p67 = scmp.ne.s32.totalorder %s50, %s66
    %p68 = scmp.eq.s32.totalorder %s16, 0
    %p69 = por %p67, %p68
    %s71 = sadd.s32 %s70, 1
    %p74 = scmp.eq.s32.totalorder %s10, 1
    %p75 = scmp.ne.s32.totalorder %s70, %s72
    %p76 = scmp.eq.s32.totalorder %s10, 0
    %p77 = por %p75, %p76
    %p78 = scmp.ne.s32.totalorder %s70, %s72
    %p79 = scmp.eq.s32.totalorder %s15, 1
    %p80 = por %p78, %p79
    %p81 = scmp.ne.s32.totalorder %s72, %s73
    %p82 = scmp.eq.s32.totalorder %s15, 0
    %p83 = por %p81, %p82
    %p84 = scmp.ne.s32.totalorder %s72, %s73
    %p85 = scmp.eq.s32.totalorder %s16, 1
    %p86 = por %p84, %p85
    %p88 = scmp.ne.s32.totalorder %s73, %s87
    %p89 = scmp.eq.s32.totalorder %s16, 0
    %p90 = por %p88, %p89
    %s92 = sadd.s32 %s91, 1
    %p95 = scmp.eq.s32.totalorder %s10, 1
    %p96 = scmp.ne.s32.totalorder %s91, %s93
    %p97 = scmp.eq.s32.totalorder %s10, 0
    %p98 = por %p96, %p97
    %p99 = scmp.ne.s32.totalorder %s91, %s93
    %p100 = scmp.eq.s32.totalorder %s15, 1
    %p101 = por %p99, %p100
    %p102 = scmp.ne.s32.totalorder %s93, %s94
    %p103 = scmp.eq.s32.totalorder %s15, 0
    %p104 = por %p102, %p103
    %p105 = scmp.ne.s32.totalorder %s93, %s94
    %p106 = scmp.eq.s32.totalorder %s16, 1
    %p107 = por %p105, %p106
    %p109 = scmp.ne.s32.totalorder %s94, %s108
    %p110 = scmp.eq.s32.totalorder %s16, 0
    %p111 = por %p109, %p110
    %s112 = ssub.s32 %s10, %s17
    %p113 = scmp.eq.s32.totalorder %s112, 0
    %s115 = sadd.s32 %s114, 1
    %s116 = scalar_select %p113, %s114, %s115
    %p119 = pneg %p113
    %p120 = scmp.eq.s32.totalorder %s10, 1
    %p121 = por %p119, %p120
    %p122 = scmp.ne.s32.totalorder %s114, %s117
    %p123 = scmp.eq.s32.totalorder %s10, 0
    %p124 = por %p122, %p123
    %p125 = scmp.ne.s32.totalorder %s114, %s117
    %p126 = scmp.eq.s32.totalorder %s15, 1
    %p127 = por %p125, %p126
    %p128 = scmp.ne.s32.totalorder %s117, %s118
    %p129 = scmp.eq.s32.totalorder %s15, 0
    %p130 = por %p128, %p129
    %p131 = scmp.ne.s32.totalorder %s117, %s118
    %p132 = scmp.eq.s32.totalorder %s16, 1
    %p133 = por %p131, %p132
    %p135 = scmp.ne.s32.totalorder %s118, %s134
    %p136 = scmp.eq.s32.totalorder %s16, 0
    %p137 = por %p135, %p136
    %p138 = scmp.le.s32.totalorder 1, %s10
    %p139 = scmp.lt.s32.totalorder %s10, 3
    %p140 = pnand %p138, %p139
    %p141 = pneg %p140
    // Predicated region
    $region9: #{tpu_custom_call.1} parent=5 // pred_check
      _
    $region10: #{tpu_custom_call.1} parent=5 // pred_check_branch
      %143 = sbr.rel (%p140) target = $region12
    $region11: #{tpu_custom_call.1} parent=5 // pred_region
      %s144 = ssub.s32 %s10, 1
      // Predicated region
      $region13: #{tpu_custom_call.1} parent=11 // pred_check
        %p145 = pneg %p83
      $region14: #{tpu_custom_call.1} parent=11 // pred_check_branch
        %147 = sbr.rel (%p145) target = $region16
      $region15: #{tpu_custom_call.1} parent=11 // pred_region
        _
      $region16: #{tpu_custom_call.1} parent=11 // pred_fallthru
        _
      // Predicated region
      $region17: #{tpu_custom_call.1} parent=11 // pred_check
        %p148 = pneg %p104
      $region18: #{tpu_custom_call.1} parent=11 // pred_check_branch
        %150 = sbr.rel (%p148) target = $region20
      $region19: #{tpu_custom_call.1} parent=11 // pred_region
        _
      $region20: #{tpu_custom_call.1} parent=11 // pred_fallthru
        _
    $region12: #{tpu_custom_call.1} parent=5 // pred_fallthru
      _
    %p151 = scmp.lt.s32.totalorder %s10, 2
    // Predicated region
    $region21: #{tpu_custom_call.1} parent=5 // pred_check
      %p152 = pneg %p151
    $region22: #{tpu_custom_call.1} parent=5 // pred_check_branch
      %154 = sbr.rel (%p152) target = $region24
    $region23: #{tpu_custom_call.1} parent=5 // pred_region
      // Predicated region
      $region25: #{tpu_custom_call.1} parent=23 // pred_check
        %p155 = pneg %p30
      $region26: #{tpu_custom_call.1} parent=23 // pred_check_branch
        %157 = sbr.rel (%p155) target = $region28
      $region27: #{tpu_custom_call.1} parent=23 // pred_region
        %p158 = scmp.lt.s32.totalorder %s10, 1
        %s159 = scalar_select %p158, %s10, 1
        %s160 = smul.addr %s159, 2
        %s161 = smul.addr %s160, 8
        %s162 = scalar_lea.vmem %s0, %s161
      $region28: #{tpu_custom_call.1} parent=23 // pred_fallthru
        _
      // Predicated region
      $region29: #{tpu_custom_call.1} parent=23 // pred_check
        %p163 = pneg %p56
      $region30: #{tpu_custom_call.1} parent=23 // pred_check_branch
        %165 = sbr.rel (%p163) target = $region32
      $region31: #{tpu_custom_call.1} parent=23 // pred_region
        %p166 = scmp.lt.s32.totalorder %s10, 1
        %s167 = scalar_select %p166, %s10, 1
        %s168 = smul.addr %s167, 2
        %s169 = smul.addr %s168, 8
        %s170 = scalar_lea.vmem %s1, %s169
      $region32: #{tpu_custom_call.1} parent=23 // pred_fallthru
        _
    $region24: #{tpu_custom_call.1} parent=5 // pred_fallthru
      _
    %p171 = scmp.le.s32.totalorder 1, %s10
    %p172 = scmp.lt.s32.totalorder %s10, 3
    %p173 = pnand %p171, %p172
    %p174 = pneg %p173
    // Predicated region
    $region33: #{tpu_custom_call.1} parent=5 // pred_check
      _
    $region34: #{tpu_custom_call.1} parent=5 // pred_check_branch
      %176 = sbr.rel (%p173) target = $region36
    $region35: #{tpu_custom_call.1} parent=5 // pred_region
      %s177 = ssub.s32 %s10, 1
      %p178 = scmp.lt.s32.totalorder %s15, 1
      %s179 = scalar_select %p178, %s15, 1
      %s180 = smul.addr %s179, 2
      %s181 = smul.addr %s180, 8
      %s182 = scalar_lea.vmem %s0, %s181
      %p183 = pneg %p36
      %p184 = pneg %p33
      %p185 = scmp.lt.s32.totalorder %s15, 1
      %s186 = scalar_select %p185, %s15, 1
      %s187 = smul.addr %s186, 2
      %s188 = smul.addr %s187, 8
      %s189 = scalar_lea.vmem %s1, %s188
      %p190 = pneg %p62
      %p191 = pneg %p59
      %p192 = pneg %p83
      %p193 = pneg %p80
      %p194 = pneg %p104
      %p195 = pneg %p101
      %p196 = pneg %p130
      %p197 = pneg %p127
      %p198 = scmp.lt.s32.totalorder %s15, 1
      %s199 = scalar_select %p198, %s15, 1
      %s200 = smul.addr %s199, 4
      %s201 = smul.addr %s200, 8
      %s202 = scalar_lea.vmem %s4, %s201
      %p203 = scmp.lt.s32.totalorder %s15, 1
      %s204 = scalar_select %p203, %s15, 1
      %s205 = smul.addr %s204, 2
      %s206 = smul.addr %s205, 8
      %s207 = scalar_lea.vmem %s0, %s206
      %p208 = scmp.lt.s32.totalorder %s15, 1
      %s209 = scalar_select %p208, %s15, 1
      %s210 = smul.addr %s209, 2
      %s211 = smul.addr %s210, 8
      %s212 = scalar_lea.vmem %s1, %s211
      %p213 = scmp.lt.s32.totalorder %s15, 1
      %s214 = scalar_select %p213, %s15, 1
      %s215 = smul.addr %s214, 4
      %s216 = smul.addr %s215, 8
      %s217 = scalar_lea.vmem %s4, %s216
      %v218 = vld [vmem:[%s212] sm:$0xff]
      %v219 = vld [vmem:[%s212 + $0x8] sm:$0xff]
      %v220 = vld [vmem:[%s207] sm:$0xff]
      %v221 = vld [vmem:[%s207 + $0x8] sm:$0xff]
      %vm222 = vcmask 130048
      %v223 = vsel %vm222, %v218, 0.0
      %224 = vadd.xlane.f32.xlu0 %v223
      %v225 = vpop.xlane.xlu0 %224
      %v226 = vsel %vm222, %v219, 0.0
      %227 = vadd.xlane.f32.xlu0 %v226
      %v228 = vpop.xlane.xlu0 %227
      %v229 = vadd.f32 %v225, 1e-05
      %v230 = vadd.f32 %v228, 1e-05
      %v231 = vrsqrt.pop %v229
      %v232 = vmul.f32 %v231, %v229
      %v233 = vmul.f32 %v232, %v231
      %v234 = vmul.f32 0.5, %v233
      %v235 = vsub.f32 1.5, %v234
      %v236 = vmul.f32 %v231, %v235
      %vm237 = vweird.f32 %v229
      %vm238 = vweird.f32 %v231
      %vm239 = vmor %vm237, %vm238
      %v240 = vsel %vm239, %v231, %v236
      %v241 = vrsqrt.pop %v230
      %v242 = vmul.f32 %v241, %v230
      %v243 = vmul.f32 %v242, %v241
      %v244 = vmul.f32 0.5, %v243
      %v245 = vsub.f32 1.5, %v244
      %v246 = vmul.f32 %v241, %v245
      %vm247 = vweird.f32 %v230
      %vm248 = vweird.f32 %v241
      %vm249 = vmor %vm247, %vm248
      %v250 = vsel %vm249, %v241, %v246
      %v251 = vld [vmem:[%s2] sm:$0xff]
      %vm252 = vcmask 64512
      %v254 = vsel %vm252, %v220, 0
      %v257 = vsel %vm252, %v221, 0
      %259 = vmatpush.msra.mxu0 0.0
      %260 = vmatpush.msra.mxu0 0.0
      %261 = vmatpush.msra.mxu0 0.0
      %262 = vmatpush.msra.mxu0 0.0
      %263 = vmatpush.msra.mxu0 0.0
      %264 = vmatpush.msra.mxu0 0.0
      %265 = vmatpush.msra.mxu0 0.0
      %266 = vmatpush.msra.mxu0 0.0
      %267 = vmatpush.msra.mxu0 0.0
      %268 = vmatpush.msra.mxu0 0.0
      %269 = vmatpush.msra.mxu0 0.0
      %270 = vmatpush.msra.mxu0 0.0
      %271 = vmatpush.msra.mxu0 0.0
      %272 = vmatpush.msra.mxu0 0.0
      %273 = vmatpush.msra.mxu0 0.0
      %274 = vmatpush.msra.mxu0 %v251
      %275 = vmatmul.f32.gmra.mxu0 %v254
      %v276 = vpop.f32.mrf.mxu0
      %v277 = vadd.f32 0.0, %v276
      %278 = vmatmul.f32.gmra.mxu0 %v257
      %v279 = vpop.f32.mrf.mxu0
      %v280 = vadd.f32 0.0, %v279
      %281 = vdwg.mxu0
      %v282 = vmul.f32 %v240, %v277
      %v283 = vmul.f32 %v250, %v280
      %v285 = vsel %vm222, %v218, 0
      %v288 = vsel %vm222, %v219, 0
      %290 = vmatpush.msra.mxu0 0.0
      %291 = vmatpush.msra.mxu0 0.0
      %292 = vmatpush.msra.mxu0 0.0
      %293 = vmatpush.msra.mxu0 0.0
      %294 = vmatpush.msra.mxu0 0.0
      %295 = vmatpush.msra.mxu0 0.0
      %296 = vmatpush.msra.mxu0 0.0
      %297 = vmatpush.msra.mxu0 0.0
      %298 = vmatpush.msra.mxu0 0.0
      %299 = vmatpush.msra.mxu0 0.0
      %300 = vmatpush.msra.mxu0 0.0
      %301 = vmatpush.msra.mxu0 0.0
      %302 = vmatpush.msra.mxu0 0.0
      %303 = vmatpush.msra.mxu0 0.0
      %304 = vmatpush.msra.mxu0 %v283
      %305 = vmatpush.msra.mxu0 %v282
      %306 = vmatmul.f32.gmra.mxu0 %v285
      %v307 = vpop.f32.mrf.mxu0
      %v308 = vadd.f32 0.0, %v307
      %309 = vmatmul.f32.gmra.mxu0 %v288
      %v310 = vpop.f32.mrf.mxu0
      %v311 = vadd.f32 0.0, %v310
      %312 = vdwg.mxu0
      %v313 = vmul.f32 %v240, %v308
      %v314 = vmul.f32 %v250, %v311
      %v315 = vld [vmem:[%s3] sm:$0x1]
      %v317 = vperm.slane %v315, 0
      %v319 = vadd.f32 %v313, %v317
      %v320 = vadd.f32 %v314, %v317
      %321 = vxpose.xlu0.b32.start [1/16] %v319, 128
      %322 = vxpose.xlu0.b32.cont [2/16] %v320, 128
      %323 = vxpose.xlu0.b32.cont [3/16] 0.0, 128
      %324 = vxpose.xlu0.b32.cont [4/16] 0.0, 128
      %325 = vxpose.xlu0.b32.cont [5/16] 0.0, 128
      %326 = vxpose.xlu0.b32.cont [6/16] 0.0, 128
      %327 = vxpose.xlu0.b32.cont [7/16] 0.0, 128
      %328 = vxpose.xlu0.b32.cont [8/16] 0.0, 128
      %329 = vxpose.xlu0.b32.cont [9/16] 0.0, 128
      %330 = vxpose.xlu0.b32.cont [10/16] 0.0, 128
      %331 = vxpose.xlu0.b32.cont [11/16] 0.0, 128
      %332 = vxpose.xlu0.b32.cont [12/16] 0.0, 128
      %333 = vxpose.xlu0.b32.cont [13/16] 0.0, 128
      %334 = vxpose.xlu0.b32.cont [14/16] 0.0, 128
      %335 = vxpose.xlu0.b32.cont [15/16] 0.0, 128
      %336 = vxpose.xlu0.b32.end [16/16] 0.0, 128
      %v337 = vpop.trf.xlu0
      %v338 = vpop.trf.xlu0
      %v339 = vpop.trf.xlu0
      %v340 = vpop.trf.xlu0
      %v341 = vpop.trf.xlu0
      %v342 = vpop.trf.xlu0
      %v343 = vpop.trf.xlu0
      %v344 = vpop.trf.xlu0
      %v345 = vpop.trf.xlu0
      %v346 = vpop.trf.xlu0
      %v347 = vpop.trf.xlu0
      %v348 = vpop.trf.xlu0
      %v349 = vpop.trf.xlu0
      %v350 = vpop.trf.xlu0
      %v351 = vpop.trf.xlu0
      %v352 = vpop.trf.xlu0
      %353 = vst.msk [vmem:[%s217] sm:$0xff] %vm222, %v337
      %354 = vst.msk [vmem:[%s217 + $0x8] sm:$0xff] %vm222, %v338
      %355 = vst.msk [vmem:[%s217 + $0x10] sm:$0xff] %vm222, %v339
      %356 = vst.msk [vmem:[%s217 + $0x18] sm:$0xff] %vm222, %v340
      %p357 = scmp.lt.s32.totalorder %s15, 1
      %s358 = scalar_select %p357, %s15, 1
      %s359 = smul.addr %s358, 4
      %s360 = smul.addr %s359, 8
      %s361 = scalar_lea.vmem %s4, %s360
      // Predicated region
      $region37: #{tpu_custom_call.1} parent=35 // pred_check
        %p362 = pneg %p127
      $region38: #{tpu_custom_call.1} parent=35 // pred_check_branch
        %364 = sbr.rel (%p362) target = $region40
      $region39: #{tpu_custom_call.1} parent=35 // pred_region
        _
      $region40: #{tpu_custom_call.1} parent=35 // pred_fallthru
        _
    $region36: #{tpu_custom_call.1} parent=5 // pred_fallthru
      _
    %p365 = scmp.le.s32.totalorder 2, %s10
    // Predicated region
    $region41: #{tpu_custom_call.1} parent=5 // pred_check
      %p366 = pneg %p365
    $region42: #{tpu_custom_call.1} parent=5 // pred_check_branch
      %368 = sbr.rel (%p366) target = $region44
    $region43: #{tpu_custom_call.1} parent=5 // pred_region
      %s369 = ssub.s32 %s10, 2
      // Predicated region
      $region45: #{tpu_custom_call.1} parent=43 // pred_check
        %p370 = pneg %p133
      $region46: #{tpu_custom_call.1} parent=43 // pred_check_branch
        %372 = sbr.rel (%p370) target = $region48
      $region47: #{tpu_custom_call.1} parent=43 // pred_region
        %p373 = scmp.lt.s32.totalorder %s16, 1
        %s374 = scalar_select %p373, %s16, 1
        %s375 = smul.addr %s374, 4
        %s376 = smul.addr %s375, 8
        %s377 = scalar_lea.vmem %s4, %s376
      $region48: #{tpu_custom_call.1} parent=43 // pred_fallthru
        _
    $region44: #{tpu_custom_call.1} parent=5 // pred_fallthru
      _
  $region6: #{tpu_custom_call.1} parent=0 // loop_footer
    %s14 = sadd.s32 1, %s10
  $region7: #{tpu_custom_call.1} parent=0 // loop_footer_branch
    %9 = sbr.rel target = $region3
  $region8: #{tpu_custom_call.1} parent=0 // loop_exit
    _

</llo_original>
